<compile_context>
chip_gen: v7x
topology: tpu7x:2x2x1
jax: 0.10.0
libtpu: 0.0.40
codegen_flags: <defaults>
</compile_context>

<pallas_src>
from functools import partial

import jax
import jax.numpy as jnp
from jax import lax
from jax.experimental import pallas as pl
from jax.experimental.pallas import tpu as pltpu


# ---------------------------------------------------------------------------
# Kernels
# ---------------------------------------------------------------------------

def _fused_se_kernel(x_ref, w1t_ref, b1_ref, w2t_ref, b2_ref, o_ref, *,
                     spatial_axis):
    """Single-pass SE on one batch slab.

    channels-first: x_ref (Bt, C, HW), spatial_axis = 2
    channels-last : x_ref (Bt, HW, C), spatial_axis = 1
    w1t: (C, Cr) with 1/HW folded in; b1: (1, Cr); w2t: (Cr, C); b2: (1, C).
    """
    # Squeeze: pure sum over the spatial axis, f32 accumulate (1/HW is in w1t).
    pooled = jnp.sum(x_ref[...].astype(jnp.float32), axis=spatial_axis)

    # Excite: two tiny batched matmuls (negligible FLOPs; kernel is HBM-bound).
    h = jnp.dot(pooled, w1t_ref[...], preferred_element_type=jnp.float32)
    h = jnp.maximum(h + b1_ref[...], 0.0)                          # (Bt, Cr)
    s = jnp.dot(h, w2t_ref[...], preferred_element_type=jnp.float32)
    s = jax.nn.sigmoid(s + b2_ref[...])                            # (Bt, C)

    # Scale: re-read x (no full-tile f32 copy held live across the excite),
    # multiply in f32 to match the reference, cast on the store.
    x = x_ref[...]
    o_ref[...] = (x.astype(jnp.float32) *
                  jnp.expand_dims(s, spatial_axis)).astype(o_ref.dtype)


def _pool_excite_kernel(x_ref, w1t_ref, b1_ref, w2t_ref, b2_ref, s_ref,
                        acc_ref, *, spatial_axis, hw_total, hw_chunk):
    """Two-pass path, pass 1: spatial-sum accumulation over HW chunks; the
    excite MLP runs once on the last chunk and emits the per-image scale s.

    Grid: (batch tiles, HW chunks); HW is the (arbitrary) reduction axis.
    s_ref: (Bt, C, 1) channels-first / (Bt, 1, C) channels-last.
    acc_ref: VMEM (Bt, C) f32 scratch, re-zeroed at the start of every image.
    """
    hw_idx = pl.program_id(1)

    @pl.when(hw_idx == 0)
    def _():
        acc_ref[...] = jnp.zeros_like(acc_ref)

    x = x_ref[...].astype(jnp.float32)
    if hw_total % hw_chunk != 0:
        # Mask the ragged last chunk: out-of-bounds block reads are unspecified.
        pos = lax.broadcasted_iota(jnp.int32, x.shape, spatial_axis)
        x = jnp.where(pos + hw_idx * hw_chunk < hw_total, x, 0.0)
    acc_ref[...] += jnp.sum(x, axis=spatial_axis)

    @pl.when(hw_idx == pl.num_programs(1) - 1)
    def _():
        h = jnp.dot(acc_ref[...], w1t_ref[...],
                    preferred_element_type=jnp.float32)
        h = jnp.maximum(h + b1_ref[...], 0.0)
        s = jnp.dot(h, w2t_ref[...], preferred_element_type=jnp.float32)
        s = jax.nn.sigmoid(s + b2_ref[...])
        s_ref[...] = jnp.expand_dims(s, spatial_axis)


def _scale_kernel(x_ref, s_ref, o_ref):
    """Two-pass path, pass 2: o = x * s (s broadcast along the spatial axis).

    s has a length-1 spatial dim so plain broadcasting works for both the
    channels-first and channels-last layouts; both grid axes are 'parallel'.
    """
    o_ref[...] = (x_ref[...].astype(jnp.float32) *
                  s_ref[...]).astype(o_ref.dtype)


# ---------------------------------------------------------------------------
# Hardware queries (best-effort, with safe fallbacks)
# ---------------------------------------------------------------------------

def _vmem_capacity_bytes():
    try:
        cap = int(pltpu.get_tpu_info().vmem_capacity_bytes)
        if cap > 0:
            return cap
    except Exception:
        pass
    return 64 * 1024 * 1024        # conservative: v7x has 64 MiB per TensorCore


def _num_tensorcores():
    try:
        kind = jax.devices()[0].device_kind.lower()
    except Exception:
        return 1
    if "v7" in kind or "tpu7" in kind or "v4" in kind or "v5p" in kind:
        return 2                   # dual-TC / megacore chips
    return 1                       # v5e / v6e: single TensorCore


# ---------------------------------------------------------------------------
# Wrapper
# ---------------------------------------------------------------------------

def squeeze_excite(x_nchw, w1, b1, w2, b2, *, alias_input=False,
                   force_two_pass=False, force_channels_last=None,
                   _hw_chunk=None):
    """SE forward: sigmoid(FC2(relu(FC1(avgpool(x))))) * x.

    x_nchw: (B, C, H, W); w1: (Cr, C); b1: (Cr,); w2: (C, Cr); b2: (C,).
    Returns an array with the same shape/dtype as x_nchw.

    alias_input=True lets the output reuse x's HBM buffer (only if the caller
    no longer needs x).  force_* / _hw_chunk exist for path testing.
    """
    B, C, H, W = x_nchw.shape
    HW = H * W
    Cr = w1.shape[0]
    itemsize = jnp.dtype(x_nchw.dtype).itemsize

    num_tc = _num_tensorcores()
    vmem_cap = _vmem_capacity_bytes()
    # Slab budget ~62.5% of per-core VMEM; requested vmem_limit is sized from
    # actual need and capped at ~85% so the compiler keeps scratch headroom.
    vmem_budget = (vmem_cap * 5) // 8
    vmem_cap_req = (vmem_cap * 85) // 100

    # ---- layout: keep the lane (last) axis dense ---------------------------
    if force_channels_last is None:
        channels_last = (HW % 128 != 0) and (C >= 128)
    else:
        channels_last = bool(force_channels_last)
    if channels_last:
        # Lane-dense stores for small-HW / large-C SE blocks.  The transpose is
        # an extra HBM pass in isolation; in a real NCHW model you'd carry the
        # activation channels-last end-to-end instead.
        x_flat = jnp.transpose(x_nchw.reshape(B, C, HW), (0, 2, 1))   # (B,HW,C)
        spatial_axis = 1
    else:
        x_flat = x_nchw.reshape(B, C, HW)                             # (B,C,HW)
        spatial_axis = 2

    # ---- weights: fold 1/HW into w1, pre-transpose for (Bt,C)@(C,Cr) --------
    w1t = (w1.astype(jnp.float32) * (1.0 / HW)).T         # (C, Cr)
    w2t = w2.astype(jnp.float32).T                        # (Cr, C)
    b1r = b1.astype(jnp.float32).reshape(1, Cr)
    b2r = b2.astype(jnp.float32).reshape(1, C)

    per_image = C * HW * itemsize * 4     # (in + out) x double-buffer
    image_fits = per_image <= vmem_budget
    # On dual-TC chips a B == 1 call leaves one core idle in the fused path;
    # the two-pass split lets the scale pass (2/3 of HBM traffic) use both.
    split_b1 = (num_tc >= 2 and B == 1 and HW >= 256
                and C * HW * itemsize >= (4 << 20))
    two_pass = bool(force_two_pass) or (not image_fits) or split_b1

    alias = {"input_output_aliases": {0: 0}} if alias_input else {}

    if not two_pass:
        # =================== fused single-pass, batch-tiled =================
        bt = max(1, min(B, vmem_budget // per_image))
        if num_tc >= 2 and B >= 2:
            bt = min(bt, max(1, B // 2))     # >= 2 grid steps only for 2 TCs
        grid_b = pl.cdiv(B, bt)              # ragged last tile, no bt collapse

        blk = (bt, HW, C) if channels_last else (bt, C, HW)
        slab_bytes = bt * C * HW * itemsize
        vmem_need = 4 * slab_bytes + (2 << 20)           # slabs + weights/slack
        vmem_limit = int(min(vmem_cap_req, max(16 << 20, vmem_need)))

        x_kw = {}
        if slab_bytes < (2 << 20) and grid_b >= 4:
            # Latency-bound tiny-slab regime: deepen the input pipeline.
            x_kw = dict(pipeline_mode=pl.Buffered(3))

        kernel = partial(_fused_se_kernel, spatial_axis=spatial_axis)
        out_flat = pl.pallas_call(
            kernel,
            out_shape=jax.ShapeDtypeStruct(x_flat.shape, x_flat.dtype),
            grid_spec=pltpu.PrefetchScalarGridSpec(
                num_scalar_prefetch=0,
                grid=(grid_b,),
                in_specs=[
                    pl.BlockSpec(blk, lambda i: (i, 0, 0), **x_kw),
                    pl.BlockSpec((C, Cr), lambda i: (0, 0)),   # w1t (1/HW folded)
                    pl.BlockSpec((1, Cr), lambda i: (0, 0)),   # b1
                    pl.BlockSpec((Cr, C), lambda i: (0, 0)),   # w2t
                    pl.BlockSpec((1, C), lambda i: (0, 0)),    # b2
                ],
                out_specs=pl.BlockSpec(blk, lambda i: (i, 0, 0)),
            ),
            compiler_params=pltpu.CompilerParams(
                dimension_semantics=("parallel",),
                vmem_limit_bytes=vmem_limit),
            **alias,
        )(x_flat, w1t, b1r, w2t, b2r)

    else:
        # ========== two-pass: pool+excite over HW chunks, then scale ========
        bt = 1
        if _hw_chunk is not None:
            hw_chunk = min(int(_hw_chunk), HW)
        else:
            max_hw = max(1, vmem_budget // max(1, bt * C * itemsize * 4))
            hw_chunk = min(HW, max_hw)
            if num_tc >= 2:
                hw_chunk = min(hw_chunk, pl.cdiv(HW, 2))   # >= 2 chunks / image
            if hw_chunk < HW:
                align = 8 if channels_last else 128        # sublane vs lane axis
                hw_chunk = max(align, (hw_chunk // align) * align)
            hw_chunk = min(hw_chunk, HW)
        grid = (pl.cdiv(B, bt), pl.cdiv(HW, hw_chunk))

        if channels_last:
            x_blk = (bt, hw_chunk, C)
            x_map = lambda b, h: (b, h, 0)
            s_shape, s_blk = (B, 1, C), (bt, 1, C)
        else:
            x_blk = (bt, C, hw_chunk)
            x_map = lambda b, h: (b, 0, h)
            s_shape, s_blk = (B, C, 1), (bt, C, 1)
        s_map = lambda b, h: (b, 0, 0)
        w_map = lambda b, h: (0, 0)

        chunk_bytes = bt * C * hw_chunk * itemsize
        vmem_limit = int(min(vmem_cap_req,
                             max(16 << 20, 4 * chunk_bytes + (2 << 20))))

        pool_kernel = partial(_pool_excite_kernel, spatial_axis=spatial_axis,
                              hw_total=HW, hw_chunk=hw_chunk)
        s = pl.pallas_call(
            pool_kernel,
            out_shape=jax.ShapeDtypeStruct(s_shape, jnp.float32),
            grid_spec=pltpu.PrefetchScalarGridSpec(
                num_scalar_prefetch=0,
                grid=grid,
                in_specs=[
                    pl.BlockSpec(x_blk, x_map),
                    pl.BlockSpec((C, Cr), w_map),
                    pl.BlockSpec((1, Cr), w_map),
                    pl.BlockSpec((Cr, C), w_map),
                    pl.BlockSpec((1, C), w_map),
                ],
                out_specs=pl.BlockSpec(s_blk, s_map),
                scratch_shapes=[pltpu.VMEM((bt, C), jnp.float32)],
            ),
            compiler_params=pltpu.CompilerParams(
                dimension_semantics=("parallel", "arbitrary"),
                vmem_limit_bytes=vmem_limit),
        )(x_flat, w1t, b1r, w2t, b2r)

        out_flat = pl.pallas_call(
            _scale_kernel,
            out_shape=jax.ShapeDtypeStruct(x_flat.shape, x_flat.dtype),
            grid_spec=pltpu.PrefetchScalarGridSpec(
                num_scalar_prefetch=0,
                grid=grid,
                in_specs=[
                    pl.BlockSpec(x_blk, x_map),
                    pl.BlockSpec(s_blk, s_map),
                ],
                out_specs=pl.BlockSpec(x_blk, x_map),
            ),
            compiler_params=pltpu.CompilerParams(
                dimension_semantics=("parallel", "parallel"),
                vmem_limit_bytes=vmem_limit),
            **alias,
        )(x_flat, s)

    if channels_last:
        return jnp.transpose(out_flat, (0, 2, 1)).reshape(B, C, H, W)
    return out_flat.reshape(B, C, H, W)


# ---------------------------------------------------------------------------
# Pure-JAX reference (matches the PyTorch module semantics)
# ---------------------------------------------------------------------------

def squeeze_excite_ref(x, w1, b1, w2, b2):
    xf = x.astype(jnp.float32)
    pooled = jnp.mean(xf, axis=(2, 3))                        # (B, C)
    h = jnp.maximum(pooled @ w1.astype(jnp.float32).T + b1, 0.0)
    s = jax.nn.sigmoid(h @ w2.astype(jnp.float32).T + b2)     # (B, C)
    return (xf * s[:, :, None, None]).astype(x.dtype)


if __name__ == "__main__":
    def make_inputs(key, B, C, H, W, reduction=0.25):
        Cr = max(1, int(round(C * reduction)))
        kx, kw1, kb1, kw2, kb2 = jax.random.split(key, 5)
        x = jax.random.normal(kx, (B, C, H, W), dtype=jnp.float32)
        w1 = jax.random.normal(kw1, (Cr, C), dtype=jnp.float32) * 0.1
        b1 = jax.random.normal(kb1, (Cr,), dtype=jnp.float32) * 0.1
        w2 = jax.random.normal(kw2, (C, Cr), dtype=jnp.float32) * 0.1
        b2 = jax.random.normal(kb2, (C,), dtype=jnp.float32) * 0.1
        return x, w1, b1, w2, b2

    keys = jax.random.split(jax.random.PRNGKey(0), 4)

    # 1) canonical fused channels-first path (HW is a multiple of 128).
    args = make_inputs(keys[0], 2, 8, 16, 16)
    out = jax.block_until_ready(squeeze_excite(*args))
    assert out.shape == args[0].shape
    assert jnp.allclose(out, squeeze_excite_ref(*args), atol=1e-5, rtol=1e-5), \
        "fused channels-first mismatch"

    # 2) fused channels-last path (small HW, late-stage-SE style layout).
    args = make_inputs(keys[1], 2, 16, 7, 7)
    out = jax.block_until_ready(
        squeeze_excite(*args, force_channels_last=True))
    assert jnp.allclose(out, squeeze_excite_ref(*args), atol=1e-5, rtol=1e-5), \
        "fused channels-last mismatch"

    # 3) two-pass channels-first path with a ragged last HW chunk (masked pool).
    args = make_inputs(keys[2], 3, 8, 16, 20)
    out = jax.block_until_ready(
        squeeze_excite(*args, force_two_pass=True, _hw_chunk=128))
    assert jnp.allclose(out, squeeze_excite_ref(*args), atol=1e-5, rtol=1e-5), \
        "two-pass channels-first mismatch"

    # 4) two-pass channels-last path (B=1, ragged sublane chunk).
    args = make_inputs(keys[3], 1, 16, 10, 10)
    out = jax.block_until_ready(
        squeeze_excite(*args, force_two_pass=True, force_channels_last=True,
                       _hw_chunk=48))
    assert jnp.allclose(out, squeeze_excite_ref(*args), atol=1e-5, rtol=1e-5), \
        "two-pass channels-last mismatch"

    print("KERNEL_OK")
</pallas_src>

<mosaic_0001>
module attributes {stable_mosaic.version = 11 : i64} {
  func.func @_fused_se_kernel(%arg0: i32, %arg1: memref<2x8x256xf32, #tpu.memory_space<vmem>>, %arg2: memref<8x2xf32, #tpu.memory_space<vmem>>, %arg3: memref<1x2xf32, #tpu.memory_space<vmem>>, %arg4: memref<2x8xf32, #tpu.memory_space<vmem>>, %arg5: memref<1x8xf32, #tpu.memory_space<vmem>>, %arg6: memref<2x8x256xf32, #tpu.memory_space<vmem>>) attributes {dimension_semantics = [#tpu.dimension_semantics<parallel>], iteration_bounds = array<i64: 1>, scalar_prefetch = 0 : i64, scratch_operands = 0 : i64, tpu.core_type = #tpu.core_type<tc>, window_params = [{transform_indices = @transform_0, window_bounds = array<i64: 2, 8, 256>}, {pipeline_mode = #tpu.pipeline_mode<synchronous>, transform_indices = @transform_1, window_bounds = array<i64: 8, 2>}, {pipeline_mode = #tpu.pipeline_mode<synchronous>, transform_indices = @transform_2, window_bounds = array<i64: 1, 2>}, {pipeline_mode = #tpu.pipeline_mode<synchronous>, transform_indices = @transform_3, window_bounds = array<i64: 2, 8>}, {pipeline_mode = #tpu.pipeline_mode<synchronous>, transform_indices = @transform_4, window_bounds = array<i64: 1, 8>}, {transform_indices = @transform_5, window_bounds = array<i64: 2, 8, 256>}]} {
    %c0 = arith.constant 0 : index
    %c0_0 = arith.constant 0 : index
    %c0_1 = arith.constant 0 : index
    %0 = vector.load %arg1[%c0, %c0_0, %c0_1] : memref<2x8x256xf32, #tpu.memory_space<vmem>>, vector<2x8x256xf32>
    %cst = arith.constant dense<0.000000e+00> : vector<2x8xf32>
    %1 = vector.multi_reduction <add>, %0, %cst [2] : vector<2x8x256xf32> to vector<2x8xf32>
    %c0_2 = arith.constant 0 : index
    %c0_3 = arith.constant 0 : index
    %2 = vector.load %arg2[%c0_2, %c0_3] : memref<8x2xf32, #tpu.memory_space<vmem>>, vector<8x2xf32>
    %cst_4 = arith.constant dense<0.000000e+00> : vector<2x2xf32>
    %3 = tpu.matmul %1, %2, %cst_4 {dimension_numbers = #tpu.dot_dimension_numbers<[1], [0], [0], [1], [0, 0, 1, 1], [], []>} : vector<2x8xf32>, vector<8x2xf32>, vector<2x2xf32> -> vector<2x2xf32>
    %c0_5 = arith.constant 0 : index
    %c0_6 = arith.constant 0 : index
    %4 = vector.load %arg3[%c0_5, %c0_6] : memref<1x2xf32, #tpu.memory_space<vmem>>, vector<1x2xf32>
    %5 = vector.broadcast %4 : vector<1x2xf32> to vector<2x2xf32>
    %6 = arith.addf %3, %5 : vector<2x2xf32>
    %cst_7 = arith.constant 0.000000e+00 : f32
    %7 = vector.broadcast %cst_7 : f32 to vector<2x2xf32>
    %8 = arith.maximumf %6, %7 : vector<2x2xf32>
    %c0_8 = arith.constant 0 : index
    %c0_9 = arith.constant 0 : index
    %9 = vector.load %arg4[%c0_8, %c0_9] : memref<2x8xf32, #tpu.memory_space<vmem>>, vector<2x8xf32>
    %cst_10 = arith.constant dense<0.000000e+00> : vector<2x8xf32>
    %10 = tpu.matmul %8, %9, %cst_10 {dimension_numbers = #tpu.dot_dimension_numbers<[1], [0], [0], [1], [0, 0, 1, 1], [], []>} : vector<2x2xf32>, vector<2x8xf32>, vector<2x8xf32> -> vector<2x8xf32>
    %c0_11 = arith.constant 0 : index
    %c0_12 = arith.constant 0 : index
    %11 = vector.load %arg5[%c0_11, %c0_12] : memref<1x8xf32, #tpu.memory_space<vmem>>, vector<1x8xf32>
    %12 = vector.broadcast %11 : vector<1x8xf32> to vector<2x8xf32>
    %13 = arith.addf %10, %12 : vector<2x8xf32>
    %14 = arith.negf %13 : vector<2x8xf32>
    %15 = math.exp %14 : vector<2x8xf32>
    %cst_13 = arith.constant 1.000000e+00 : f32
    %16 = vector.broadcast %cst_13 : f32 to vector<2x8xf32>
    %17 = arith.addf %16, %15 : vector<2x8xf32>
    %18 = arith.divf %16, %17 : vector<2x8xf32>
    %c0_14 = arith.constant 0 : index
    %c0_15 = arith.constant 0 : index
    %c0_16 = arith.constant 0 : index
    %19 = vector.load %arg1[%c0_14, %c0_15, %c0_16] : memref<2x8x256xf32, #tpu.memory_space<vmem>>, vector<2x8x256xf32>
    %20 = vector.shape_cast %18 : vector<2x8xf32> to vector<2x8x1xf32>
    %21 = vector.broadcast %20 : vector<2x8x1xf32> to vector<2x8x256xf32>
    %22 = arith.mulf %19, %21 : vector<2x8x256xf32>
    %c0_17 = arith.constant 0 : index
    %c0_18 = arith.constant 0 : index
    %c0_19 = arith.constant 0 : index
    %23 = vector.load %arg6[%c0_17, %c0_18, %c0_19] : memref<2x8x256xf32, #tpu.memory_space<vmem>>, vector<2x8x256xf32>
    tpu.vector_store %arg6[%c0_17, %c0_18, %c0_19], %22 {strides = array<i32>} : memref<2x8x256xf32, #tpu.memory_space<vmem>>, vector<2x8x256xf32>,
    return
  }
  func.func @transform_0(%arg0: i32) -> (i32, i32, i32) {
    %c0_i32 = arith.constant 0 : i32
    %c0_i32_0 = arith.constant 0 : i32
    %c0_i32_1 = arith.constant 0 : i32
    return %arg0, %c0_i32, %c0_i32_0 : i32, i32, i32
  }
  func.func @transform_1(%arg0: i32) -> (i32, i32) {
    %c0_i32 = arith.constant 0 : i32
    %c0_i32_0 = arith.constant 0 : i32
    %c0_i32_1 = arith.constant 0 : i32
    return %c0_i32, %c0_i32_0 : i32, i32
  }
  func.func @transform_2(%arg0: i32) -> (i32, i32) {
    %c0_i32 = arith.constant 0 : i32
    %c0_i32_0 = arith.constant 0 : i32
    %c0_i32_1 = arith.constant 0 : i32
    return %c0_i32, %c0_i32_0 : i32, i32
  }
  func.func @transform_3(%arg0: i32) -> (i32, i32) {
    %c0_i32 = arith.constant 0 : i32
    %c0_i32_0 = arith.constant 0 : i32
    %c0_i32_1 = arith.constant 0 : i32
    return %c0_i32, %c0_i32_0 : i32, i32
  }
  func.func @transform_4(%arg0: i32) -> (i32, i32) {
    %c0_i32 = arith.constant 0 : i32
    %c0_i32_0 = arith.constant 0 : i32
    %c0_i32_1 = arith.constant 0 : i32
    return %c0_i32, %c0_i32_0 : i32, i32
  }
  func.func @transform_5(%arg0: i32) -> (i32, i32, i32) {
    %c0_i32 = arith.constant 0 : i32
    %c0_i32_0 = arith.constant 0 : i32
    %c0_i32_1 = arith.constant 0 : i32
    return %arg0, %c0_i32, %c0_i32_0 : i32, i32, i32
  }
}

</mosaic_0001>

<llo_original>
// kernel: tpu_custom_call.1
$region0: #{tpu_custom_call.1}
  #allocation0 [shape = 'u32[]', space=smem, size = 0x4, offset = 0x4, fixed_abs, tag = 'smem constant byte address 0x4 - core index']
  #allocation1 [shape = 'u32[144,128]{1,0:T(1,128)}', space=vmem, size = 0x12000, scoped, tag = 'internal scratch']
  %s0 = inlined_call_operand.hbm [shape: f32[2,8,256], index: 0, kind: input, shape index: {}]
  %s1 = inlined_call_operand.vmem [shape: f32[8,2], index: 1, kind: input, shape index: {}]
  %s2 = inlined_call_operand.vmem [shape: f32[1,2], index: 2, kind: input, shape index: {}]
  %s3 = inlined_call_operand.vmem [shape: f32[2,8], index: 3, kind: input, shape index: {}]
  %s4 = inlined_call_operand.vmem [shape: f32[1,8], index: 4, kind: input, shape index: {}]
  %s5 = inlined_call_operand.hbm [shape: f32[2,8,256], index: 5, kind: output, shape index: {}]
  %s6 = sld [smem:[#allocation0]]
  $region34: #{tpu_custom_call.1} parent=0
    _
  %s8 = ssub.s32 1, %s6
  %s9 = scalar_select 0, %s8, %s6
  $region1: #{tpu_custom_call.1} parent=0
    #allocation2 [shape = 'u8[16384]{0}', space=vmem, size = 0x4000, scoped, tag = 'input window, operand 0, single buffered']
    #allocation3 [shape = 's32[1]{0}', space=sflag, size = 0x4, scoped, tag = 'scoped memory for tpu_custom_call.1']
    #allocation4 [shape = 's32[1]{0}', space=sflag, size = 0x4, scoped, tag = 'scoped memory for tpu_custom_call.1']
    #allocation5 [shape = 'u8[16384]{0}', space=vmem, size = 0x4000, scoped, tag = 'output window, operand 0, single buffered']
    %10 = vsyncpa [#allocation3], 0
    %11 = vsyncpa [#allocation4], 0
    // Predicated region
    $region2: #{tpu_custom_call.1} parent=1 // pred_check
      _
    $region3: #{tpu_custom_call.1} parent=1 // pred_check_branch
      %13 = sbr.rel (0) target = $region5
    $region4: #{tpu_custom_call.1} parent=1 // pred_region
      %s15 = ssub.s32 512, 512
      %16 = vsyncadd [#allocation3], %s15
      %s17 = sshll.u32 [#allocation2], 4
      %s18 = int_to_ptr.vmem [resolvable:$true] %s17
      %23 = dma.hbm_to_vmem [thread:$0]  %s0, 512, %s18, [#allocation3], 256, 256, 16
    $region5: #{tpu_custom_call.1} parent=1 // pred_fallthru
      _
    // Predicated region
    $region6: #{tpu_custom_call.1} parent=1 // pred_check
      _
    $region7: #{tpu_custom_call.1} parent=1 // pred_check_branch
      %25 = sbr.rel (0) target = $region9
    $region8: #{tpu_custom_call.1} parent=1 // pred_region
      _
    $region9: #{tpu_custom_call.1} parent=1 // pred_fallthru
      _
    // Predicated region
    $region10: #{tpu_custom_call.1} parent=1 // pred_check
      _
    $region11: #{tpu_custom_call.1} parent=1 // pred_check_branch
      %27 = sbr.rel (0) target = $region13
    $region12: #{tpu_custom_call.1} parent=1 // pred_region
      _
    $region13: #{tpu_custom_call.1} parent=1 // pred_fallthru
      _
    // Predicated region
    $region14: #{tpu_custom_call.1} parent=1 // pred_check
      _
    $region15: #{tpu_custom_call.1} parent=1 // pred_check_branch
      %29 = sbr.rel (0) target = $region17
    $region16: #{tpu_custom_call.1} parent=1 // pred_region
      _
    $region17: #{tpu_custom_call.1} parent=1 // pred_fallthru
      _
    // Predicated region
    $region18: #{tpu_custom_call.1} parent=1 // pred_check
      _
    $region19: #{tpu_custom_call.1} parent=1 // pred_check_branch
      %31 = sbr.rel (0) target = $region21
    $region20: #{tpu_custom_call.1} parent=1 // pred_region
      _
    $region21: #{tpu_custom_call.1} parent=1 // pred_fallthru
      _
    // Predicated region
    $region22: #{tpu_custom_call.1} parent=1 // pred_check
      _
    $region23: #{tpu_custom_call.1} parent=1 // pred_check_branch
      %33 = sbr.rel (0) target = $region25
    $region24: #{tpu_custom_call.1} parent=1 // pred_region
      %34 = dma.done [#allocation3], 512
    $region25: #{tpu_custom_call.1} parent=1 // pred_fallthru
      _
    %v35 = vld [vmem:[#allocation2] sm:$0xff]
    %v36 = vld [vmem:[#allocation2 + $0x8] sm:$0xff]
    %v37 = vld [vmem:[#allocation2 + $0x10] sm:$0xff]
    %v38 = vld [vmem:[#allocation2 + $0x18] sm:$0xff]
    %v39 = vadd.f32 %v35, %v36
    %40 = vadd.xlane.f32.xlu0 %v39
    %v41 = vpop.xlane.xlu0 %40
    %v42 = vadd.f32 %v37, %v38
    %43 = vadd.xlane.f32.xlu0 %v42
    %v44 = vpop.xlane.xlu0 %43
    %v45 = vld [vmem:[%s1] sm:$0xff]
    %v46 = vld [vmem:[%s2] sm:$0x1]
    %v48 = vlaneseq
    %v49 = vshrl.u32 %v48, 7
    %v50 = vsub.s32 0, %v49
    %v51 = vrot.slane %v46, %v50
    %v55 = vlaneseq
    %v56 = vand.u32 %v55, 127
    %v57 = vlaneseq
    %v58 = vshrl.u32 %v57, 7
    %v59 = vsub.s32 %v56, %v58
    %v60 = vrot.slane %v41, %v59
    %v61 = vlaneseq
    %v62 = vshrl.u32 %v61, 7
    %v63 = vsub.s32 %v56, %v62
    %v64 = vrot.slane %v44, %v63
    %vm65 = vcmask 1041409
    %v66 = vsel %vm65, %v64, %v60
    %vm67 = vcmask 64512
    %v68 = vsel %vm67, %v66, 0
    %70 = vmatprep.subr.mxu0 0.0
    %71 = vmatpush1.msra.mxu0 %v45
    %72 = vmatprep.subr.mxu0 0.0
    %73 = vmatpush1.msra.mxu0 0.0
    %74 = vmatprep.subr.mxu0 0.0
    %75 = vmatpush1.msra.mxu0 0.0
    %76 = vmatprep.subr.mxu0 0.0
    %77 = vmatpush1.msra.mxu0 0.0
    %78 = vmatprep.subr.mxu0 0.0
    %79 = vmatpush1.msra.mxu0 0.0
    %80 = vmatprep.subr.mxu0 0.0
    %81 = vmatpush1.msra.mxu0 0.0
    %82 = vmatprep.subr.mxu0 0.0
    %83 = vmatpush1.msra.mxu0 0.0
    %84 = vmatprep.subr.mxu0 0.0
    %85 = vmatpush1.msra.mxu0 0.0
    %86 = vmatprep.subr.mxu0 0.0
    %87 = vmatpush1.msra.mxu0 0.0
    %88 = vmatprep.subr.mxu0 0.0
    %89 = vmatpush1.msra.mxu0 0.0
    %90 = vmatprep.subr.mxu0 0.0
    %91 = vmatpush1.msra.mxu0 0.0
    %92 = vmatprep.subr.mxu0 0.0
    %93 = vmatpush1.msra.mxu0 0.0
    %94 = vmatprep.subr.mxu0 0.0
    %95 = vmatpush1.msra.mxu0 0.0
    %96 = vmatprep.subr.mxu0 0.0
    %97 = vmatpush1.msra.mxu0 0.0
    %98 = vmatprep.subr.mxu0 0.0
    %99 = vmatpush1.msra.mxu0 0.0
    %100 = vmatprep.subr.mxu0 0.0
    %101 = vmatpush1.msra.mxu0 0.0
    %102 = vmatprep.subr.mxu0 0.0
    %103 = vmatpush1.msra.mxu0 0.0
    %104 = vmatprep.subr.mxu0 0.0
    %105 = vmatpush1.msra.mxu0 0.0
    %106 = vmatprep.subr.mxu0 0.0
    %107 = vmatpush1.msra.mxu0 0.0
    %108 = vmatprep.subr.mxu0 0.0
    %109 = vmatpush1.msra.mxu0 0.0
    %110 = vmatprep.subr.mxu0 0.0
    %111 = vmatpush1.msra.mxu0 0.0
    %112 = vmatprep.subr.mxu0 0.0
    %113 = vmatpush1.msra.mxu0 0.0
    %114 = vmatprep.subr.mxu0 0.0
    %115 = vmatpush1.msra.mxu0 0.0
    %116 = vmatprep.subr.mxu0 0.0
    %117 = vmatpush1.msra.mxu0 0.0
    %118 = vmatprep.subr.mxu0 0.0
    %119 = vmatpush1.msra.mxu0 0.0
    %120 = vmatprep.subr.mxu0 0.0
    %121 = vmatpush1.msra.mxu0 0.0
    %122 = vmatprep.subr.mxu0 0.0
    %123 = vmatpush1.msra.mxu0 0.0
    %124 = vmatprep.subr.mxu0 0.0
    %125 = vmatpush1.msra.mxu0 0.0
    %126 = vmatprep.subr.mxu0 0.0
    %127 = vmatpush1.msra.mxu0 0.0
    %128 = vmatprep.subr.mxu0 0.0
    %129 = vmatpush1.msra.mxu0 0.0
    %130 = vmatprep.subr.mxu0 0.0
    %131 = vmatpush1.msra.mxu0 0.0
    %132 = vmatprep.subr.mxu0 0.0
    %133 = vmatpush1.msra.mxu0 0.0
    %134 = vmatprep.mubr.f32.mxu0 0.0
    %135 = vmatmul.mubr.f32.gmra.mrb[0].mxu0 %v68
    %v136 = vpop.f32.mrb[0].mxu0
    %v137 = vadd.f32 %v51, %v136
    %v138 = vpop.f32.mrb[0].mxu0
    %139 = vdwg.mxu0
    %v140 = vmax.f32 %v137, 0.0
    %v141 = vld [vmem:[%s3] sm:$0x3]
    %v142 = vld [vmem:[%s4] sm:$0x1]
    %v144 = vlaneseq
    %v145 = vshrl.u32 %v144, 7
    %v146 = vsub.s32 0, %v145
    %v147 = vrot.slane %v142, %v146
    %vm149 = vcmask 15360
    %v151 = vsel %vm149, %v140, 0
    %vm153 = vcmask 1041408
    %v155 = vsel %vm153, %v141, 0
    %157 = vmatprep.subr.mxu0 0.0
    %158 = vmatpush1.msra.mxu0 %v155
    %159 = vmatprep.subr.mxu0 0.0
    %160 = vmatpush1.msra.mxu0 0.0
    %161 = vmatprep.subr.mxu0 0.0
    %162 = vmatpush1.msra.mxu0 0.0
    %163 = vmatprep.subr.mxu0 0.0
    %164 = vmatpush1.msra.mxu0 0.0
    %165 = vmatprep.subr.mxu0 0.0
    %166 = vmatpush1.msra.mxu0 0.0
    %167 = vmatprep.subr.mxu0 0.0
    %168 = vmatpush1.msra.mxu0 0.0
    %169 = vmatprep.subr.mxu0 0.0
    %170 = vmatpush1.msra.mxu0 0.0
    %171 = vmatprep.subr.mxu0 0.0
    %172 = vmatpush1.msra.mxu0 0.0
    %173 = vmatprep.subr.mxu0 0.0
    %174 = vmatpush1.msra.mxu0 0.0
    %175 = vmatprep.subr.mxu0 0.0
    %176 = vmatpush1.msra.mxu0 0.0
    %177 = vmatprep.subr.mxu0 0.0
    %178 = vmatpush1.msra.mxu0 0.0
    %179 = vmatprep.subr.mxu0 0.0
    %180 = vmatpush1.msra.mxu0 0.0
    %181 = vmatprep.subr.mxu0 0.0
    %182 = vmatpush1.msra.mxu0 0.0
    %183 = vmatprep.subr.mxu0 0.0
    %184 = vmatpush1.msra.mxu0 0.0
    %185 = vmatprep.subr.mxu0 0.0
    %186 = vmatpush1.msra.mxu0 0.0
    %187 = vmatprep.subr.mxu0 0.0
    %188 = vmatpush1.msra.mxu0 0.0
    %189 = vmatprep.subr.mxu0 0.0
    %190 = vmatpush1.msra.mxu0 0.0
    %191 = vmatprep.subr.mxu0 0.0
    %192 = vmatpush1.msra.mxu0 0.0
    %193 = vmatprep.subr.mxu0 0.0
    %194 = vmatpush1.msra.mxu0 0.0
    %195 = vmatprep.subr.mxu0 0.0
    %196 = vmatpush1.msra.mxu0 0.0
    %197 = vmatprep.subr.mxu0 0.0
    %198 = vmatpush1.msra.mxu0 0.0
    %199 = vmatprep.subr.mxu0 0.0
    %200 = vmatpush1.msra.mxu0 0.0
    %201 = vmatprep.subr.mxu0 0.0
    %202 = vmatpush1.msra.mxu0 0.0
    %203 = vmatprep.subr.mxu0 0.0
    %204 = vmatpush1.msra.mxu0 0.0
    %205 = vmatprep.subr.mxu0 0.0
    %206 = vmatpush1.msra.mxu0 0.0
    %207 = vmatprep.subr.mxu0 0.0
    %208 = vmatpush1.msra.mxu0 0.0
    %209 = vmatprep.subr.mxu0 0.0
    %210 = vmatpush1.msra.mxu0 0.0
    %211 = vmatprep.subr.mxu0 0.0
    %212 = vmatpush1.msra.mxu0 0.0
    %213 = vmatprep.subr.mxu0 0.0
    %214 = vmatpush1.msra.mxu0 0.0
    %215 = vmatprep.subr.mxu0 0.0
    %216 = vmatpush1.msra.mxu0 0.0
    %217 = vmatprep.subr.mxu0 0.0
    %218 = vmatpush1.msra.mxu0 0.0
    %219 = vmatprep.subr.mxu0 0.0
    %220 = vmatpush1.msra.mxu0 0.0
    %221 = vmatprep.mubr.f32.mxu0 0.0
    %222 = vmatmul.mubr.f32.gmra.mrb[0].mxu0 %v151
    %v223 = vpop.f32.mrb[0].mxu0
    %v224 = vadd.f32 %v147, %v223
    %v225 = vpop.f32.mrb[0].mxu0
    %226 = vdwg.mxu0
    %v227 = vxor.u32 %v224, 2147483648
    %v228 = vmul.f32 %v227, 1.442695
    %v229 = vpow.pop %v228
    %v230 = vadd.f32 %v229, 1.0
    %v231 = vrcp.pop %v230
    %v232 = vmul.f32 1.0, %v231
    %v233 = vlaneseq
    %v234 = vshrl.u32 %v233, 7
    %v235 = vsub.s32 0, %v234
    %v236 = vrot.slane %v232, %v235
    %238 = vbcast.lane.b32.xlu0 %v236, 256
    %v239 = vpop.permute.xlu0 %238
    %v240 = vlaneseq
    %v241 = vshrl.u32 %v240, 7
    %v242 = vsub.s32 1, %v241
    %v243 = vrot.slane %v232, %v242
    %245 = vbcast.lane.b32.xlu0 %v243, 256
    %v246 = vpop.permute.xlu0 %245
    %v247 = vmul.f32 %v35, %v239
    %v248 = vmul.f32 %v36, %v239
    %v249 = vmul.f32 %v37, %v246
    %v250 = vmul.f32 %v38, %v246
    %251 = vst [vmem:[#allocation5] sm:$0xff] %v247
    %252 = vst [vmem:[#allocation5 + $0x8] sm:$0xff] %v248
    %253 = vst [vmem:[#allocation5 + $0x10] sm:$0xff] %v249
    %254 = vst [vmem:[#allocation5 + $0x18] sm:$0xff] %v250
    // Predicated region
    $region26: #{tpu_custom_call.1} parent=1 // pred_check
      _
    $region27: #{tpu_custom_call.1} parent=1 // pred_check_branch
      %256 = sbr.rel (0) target = $region29
    $region28: #{tpu_custom_call.1} parent=1 // pred_region
      %s258 = ssub.s32 512, 512
      %259 = vsyncadd [#allocation4], %s258
      %s260 = sshll.u32 [#allocation5], 4
      %s261 = int_to_ptr.vmem [resolvable:$true] %s260
      %266 = dma.vmem_to_hbm [thread:$0]  %s261, 512, %s5, [#allocation4], 256, 256, 16
    $region29: #{tpu_custom_call.1} parent=1 // pred_fallthru
      _
    // Predicated region
    $region30: #{tpu_custom_call.1} parent=1 // pred_check
      _
    $region31: #{tpu_custom_call.1} parent=1 // pred_check_branch
      %268 = sbr.rel (0) target = $region33
    $region32: #{tpu_custom_call.1} parent=1 // pred_region
      %269 = dma.done [#allocation4], 512
    $region33: #{tpu_custom_call.1} parent=1 // pred_fallthru
      _
    %270 = vsyncpa [#allocation3], 1
    %271 = vsyncpa [#allocation4], 1

</llo_original>
